<compile_context>
chip_gen: v7x
topology: tpu7x:2x2x1
jax: 0.10.0
libtpu: 0.0.40
codegen_flags: <defaults>
</compile_context>

<pallas_src>
import jax
import jax.numpy as jnp
from jax.experimental import pallas as pl
from jax.experimental.pallas import tpu as pltpu

# Gray conversion coefficients from GradLayer.get_gray (divided by 256).
_GRAY = (65.738 / 256.0, 129.057 / 256.0, 25.064 / 256.0)


def _gradloss_kernel(out_img_ref, gt_img_ref, loss_ref, acc_ref):
    # out_img_ref / gt_img_ref: (3, H, W) f32 VMEM block (one batch element)
    # loss_ref:                 (1, 1) f32 SMEM output (written once, at end)
    # acc_ref:                  (1,)   f32 SMEM scratch accumulator
    n_idx = pl.program_id(0)

    @pl.when(n_idx == 0)
    def _init():
        acc_ref[0] = jnp.float32(0.0)

    def grad_mag(x_ref):
        # Gray conversion (pure VPU; too small a contraction for the MXU).
        gray = (_GRAY[0] * x_ref[0]
                + _GRAY[1] * x_ref[1]
                + _GRAY[2] * x_ref[2])                      # (H, W) f32
        h, w = gray.shape
        row = jax.lax.broadcasted_iota(jnp.int32, (h, w), 0)
        col = jax.lax.broadcasted_iota(jnp.int32, (h, w), 1)
        # Zero-padded +/-1 neighbours via XLU rolls + border masks
        # (pltpu.roll matches jnp.roll: result[i] = x[i - shift mod n]).
        g_up    = jnp.where(row == 0,     0.0, pltpu.roll(gray, 1,     axis=0))
        g_down  = jnp.where(row == h - 1, 0.0, pltpu.roll(gray, h - 1, axis=0))
        g_left  = jnp.where(col == 0,     0.0, pltpu.roll(gray, 1,     axis=1))
        g_right = jnp.where(col == w - 1, 0.0, pltpu.roll(gray, w - 1, axis=1))
        x_v = g_down - g_up          # conv2d(gray, [[0,-1,0],[0,0,0],[0,1,0]])
        x_h = g_right - g_left       # conv2d(gray, [[0,0,0],[-1,0,1],[0,0,0]])
        return jnp.sqrt(x_v * x_v + x_h * x_h + 1e-6)

    diff = jnp.abs(grad_mag(out_img_ref) - grad_mag(gt_img_ref))   # (H, W)
    acc_ref[0] += jnp.sum(diff)      # per-tile partial sum

    @pl.when(n_idx == pl.num_programs(0) - 1)
    def _finalize():
        loss_ref[0, 0] = acc_ref[0]


def grad_loss(output, gt_img, w_rgb, b_rgb):
    """output, gt_img: (N, 3, H, W) float32 (NCHW, like the PyTorch module).

    w_rgb, b_rgb: gray2RGB 1x1-conv weight / bias, shape (3,).  The bias
    cancels in the L1 difference, so only |w| enters the loss.
    """
    n, c, h, w = output.shape
    assert c == 3, "GradLoss expects 3-channel inputs"
    assert h >= 2 and w >= 2

    del b_rgb  # cancels exactly: |(w*a+b) - (w*b2+b)| = |w| * |a - b2|

    raw_sum = pl.pallas_call(
        _gradloss_kernel,
        out_shape=jax.ShapeDtypeStruct((1, 1), jnp.float32),
        grid_spec=pltpu.PrefetchScalarGridSpec(
            num_scalar_prefetch=0,
            grid=(n,),
            in_specs=[
                pl.BlockSpec((None, 3, h, w), lambda i: (i, 0, 0, 0)),
                pl.BlockSpec((None, 3, h, w), lambda i: (i, 0, 0, 0)),
            ],
            out_specs=pl.BlockSpec(
                (1, 1), lambda i: (0, 0),
                memory_space=pltpu.MemorySpace.SMEM),
            scratch_shapes=[pltpu.SMEM((1,), jnp.float32)],
        ),
        compiler_params=pltpu.CompilerParams(
            dimension_semantics=("arbitrary",)),   # carried SMEM accumulator
    )(output.astype(jnp.float32), gt_img.astype(jnp.float32))

    sum_abs_w = jnp.sum(jnp.abs(w_rgb.astype(jnp.float32)))
    return raw_sum[0, 0] * sum_abs_w / jnp.float32(n * 3 * h * w)


def _grad_loss_ref(output, gt_img, w_rgb, b_rgb):
    """Pure-JAX reference (mirrors the PyTorch module literally)."""
    coeffs = jnp.array(_GRAY, jnp.float32).reshape(1, 3, 1, 1)

    def grad_layer(x):
        gray = jnp.sum(x * coeffs, axis=1)                       # (N, H, W)
        gp = jnp.pad(gray, ((0, 0), (1, 1), (1, 1)))
        x_v = gp[:, 2:, 1:-1] - gp[:, :-2, 1:-1]
        x_h = gp[:, 1:-1, 2:] - gp[:, 1:-1, :-2]
        mag = jnp.sqrt(x_v**2 + x_h**2 + 1e-6)                   # (N, H, W)
        return mag[:, None, :, :] * w_rgb.reshape(1, 3, 1, 1) + \
               b_rgb.reshape(1, 3, 1, 1)

    return jnp.mean(jnp.abs(grad_layer(output) - grad_layer(gt_img)))


if __name__ == "__main__":
    key = jax.random.PRNGKey(0)
    k1, k2, k3, k4 = jax.random.split(key, 4)

    # Small, lane-dense shapes: W = 128 keeps the last dim on full lanes.
    N, C, H, W = 2, 3, 16, 128
    output = jax.random.uniform(k1, (N, C, H, W), jnp.float32)
    gt_img = jax.random.uniform(k2, (N, C, H, W), jnp.float32)

    # Deterministic init of gray2RGB = Conv2d(1, 3, kernel_size=1):
    # PyTorch default init is U(-1/sqrt(fan_in), 1/sqrt(fan_in)), fan_in=1.
    w_rgb = jax.random.uniform(k3, (3,), jnp.float32, -1.0, 1.0)
    b_rgb = jax.random.uniform(k4, (3,), jnp.float32, -1.0, 1.0)

    loss = jax.block_until_ready(grad_loss(output, gt_img, w_rgb, b_rgb))
    ref = jax.block_until_ready(_grad_loss_ref(output, gt_img, w_rgb, b_rgb))
    assert jnp.allclose(loss, ref, rtol=1e-5, atol=1e-6), (loss, ref)

    print("KERNEL_OK")
</pallas_src>

<mosaic_0001>
module attributes {stable_mosaic.version = 11 : i64} {
  func.func @_gradloss_kernel(%arg0: i32, %arg1: memref<1x3x16x128xf32, #tpu.memory_space<vmem>>, %arg2: memref<1x3x16x128xf32, #tpu.memory_space<vmem>>, %arg3: memref<1x1xf32, #tpu.memory_space<smem>>, %arg4: memref<1xf32, #tpu.memory_space<smem>>) attributes {dimension_semantics = [#tpu.dimension_semantics<arbitrary>], iteration_bounds = array<i64: 2>, scalar_prefetch = 0 : i64, scratch_operands = 1 : i64, tpu.core_type = #tpu.core_type<tc>, window_params = [{transform_indices = @transform_0, window_bounds = array<i64: 1, 3, 16, 128>}, {transform_indices = @transform_1, window_bounds = array<i64: 1, 3, 16, 128>}, {transform_indices = @transform_2, window_bounds = array<i64: 1, 1>}]} {
    %c0_i32 = arith.constant 0 : i32
    %0 = arith.cmpi eq, %arg0, %c0_i32 : i32
    %1 = arith.extui %0 : i1 to i32
    %c0_i32_0 = arith.constant 0 : i32
    %2 = arith.cmpi ne, %1, %c0_i32_0 : i32
    scf.if %2 {
      %cst_55 = arith.constant 0.000000e+00 : f32
      %c0_56 = arith.constant 0 : index
      %103 = memref.load %arg4[%c0_56] : memref<1xf32, #tpu.memory_space<smem>>
      memref.store %cst_55, %arg4[%c0_56] : memref<1xf32, #tpu.memory_space<smem>>
    } else {
    }
    %c0 = arith.constant 0 : index
    %c0_1 = arith.constant 0 : index
    %c0_2 = arith.constant 0 : index
    %c0_3 = arith.constant 0 : index
    %3 = vector.load %arg1[%c0, %c0_1, %c0_2, %c0_3] : memref<1x3x16x128xf32, #tpu.memory_space<vmem>>, vector<1x1x16x128xf32>
    %4 = vector.shape_cast %3 : vector<1x1x16x128xf32> to vector<16x128xf32>
    %cst = arith.constant 0.256789058 : f32
    %5 = vector.broadcast %cst : f32 to vector<16x128xf32>
    %6 = arith.mulf %5, %4 : vector<16x128xf32>
    %c0_4 = arith.constant 0 : index
    %c1 = arith.constant 1 : index
    %c0_5 = arith.constant 0 : index
    %c0_6 = arith.constant 0 : index
    %7 = vector.load %arg1[%c0_4, %c1, %c0_5, %c0_6] : memref<1x3x16x128xf32, #tpu.memory_space<vmem>>, vector<1x1x16x128xf32>
    %8 = vector.shape_cast %7 : vector<1x1x16x128xf32> to vector<16x128xf32>
    %cst_7 = arith.constant 0.504128933 : f32
    %9 = vector.broadcast %cst_7 : f32 to vector<16x128xf32>
    %10 = arith.mulf %9, %8 : vector<16x128xf32>
    %11 = arith.addf %6, %10 : vector<16x128xf32>
    %c0_8 = arith.constant 0 : index
    %c2 = arith.constant 2 : index
    %c0_9 = arith.constant 0 : index
    %c0_10 = arith.constant 0 : index
    %12 = vector.load %arg1[%c0_8, %c2, %c0_9, %c0_10] : memref<1x3x16x128xf32, #tpu.memory_space<vmem>>, vector<1x1x16x128xf32>
    %13 = vector.shape_cast %12 : vector<1x1x16x128xf32> to vector<16x128xf32>
    %cst_11 = arith.constant 0.0979062467 : f32
    %14 = vector.broadcast %cst_11 : f32 to vector<16x128xf32>
    %15 = arith.mulf %14, %13 : vector<16x128xf32>
    %16 = arith.addf %11, %15 : vector<16x128xf32>
    %17 = tpu.iota {dimensions = array<i32: 0>} : vector<16x128xi32>
    %18 = tpu.iota {dimensions = array<i32: 1>} : vector<16x128xi32>
    %c0_i32_12 = arith.constant 0 : i32
    %19 = vector.broadcast %c0_i32_12 : i32 to vector<16x128xi32>
    %20 = arith.cmpi eq, %17, %19 : vector<16x128xi32>
    %c1_i32 = arith.constant 1 : i32
    %21 = tpu.dynamic_rotate %16 by %c1_i32 dim 0 : vector<16x128xf32>, i32 -> vector<16x128xf32>
    %cst_13 = arith.constant 0.000000e+00 : f32
    %22 = vector.broadcast %cst_13 : f32 to vector<16x128xf32>
    %23 = arith.select %20, %22, %21 : vector<16x128xi1>, vector<16x128xf32>
    %c15_i32 = arith.constant 15 : i32
    %24 = vector.broadcast %c15_i32 : i32 to vector<16x128xi32>
    %25 = arith.cmpi eq, %17, %24 : vector<16x128xi32>
    %c15_i32_14 = arith.constant 15 : i32
    %26 = tpu.dynamic_rotate %16 by %c15_i32_14 dim 0 : vector<16x128xf32>, i32 -> vector<16x128xf32>
    %cst_15 = arith.constant 0.000000e+00 : f32
    %27 = vector.broadcast %cst_15 : f32 to vector<16x128xf32>
    %28 = arith.select %25, %27, %26 : vector<16x128xi1>, vector<16x128xf32>
    %c0_i32_16 = arith.constant 0 : i32
    %29 = vector.broadcast %c0_i32_16 : i32 to vector<16x128xi32>
    %30 = arith.cmpi eq, %18, %29 : vector<16x128xi32>
    %c1_i32_17 = arith.constant 1 : i32
    %31 = tpu.dynamic_rotate %16 by %c1_i32_17 dim 1 : vector<16x128xf32>, i32 -> vector<16x128xf32>
    %cst_18 = arith.constant 0.000000e+00 : f32
    %32 = vector.broadcast %cst_18 : f32 to vector<16x128xf32>
    %33 = arith.select %30, %32, %31 : vector<16x128xi1>, vector<16x128xf32>
    %c127_i32 = arith.constant 127 : i32
    %34 = vector.broadcast %c127_i32 : i32 to vector<16x128xi32>
    %35 = arith.cmpi eq, %18, %34 : vector<16x128xi32>
    %c127_i32_19 = arith.constant 127 : i32
    %36 = tpu.dynamic_rotate %16 by %c127_i32_19 dim 1 : vector<16x128xf32>, i32 -> vector<16x128xf32>
    %cst_20 = arith.constant 0.000000e+00 : f32
    %37 = vector.broadcast %cst_20 : f32 to vector<16x128xf32>
    %38 = arith.select %35, %37, %36 : vector<16x128xi1>, vector<16x128xf32>
    %39 = arith.subf %28, %23 : vector<16x128xf32>
    %40 = arith.subf %38, %33 : vector<16x128xf32>
    %41 = arith.mulf %39, %39 : vector<16x128xf32>
    %42 = arith.mulf %40, %40 : vector<16x128xf32>
    %43 = arith.addf %41, %42 : vector<16x128xf32>
    %cst_21 = arith.constant 9.99999997E-7 : f32
    %44 = vector.broadcast %cst_21 : f32 to vector<16x128xf32>
    %45 = arith.addf %43, %44 : vector<16x128xf32>
    %46 = math.sqrt %45 : vector<16x128xf32>
    %c0_22 = arith.constant 0 : index
    %c0_23 = arith.constant 0 : index
    %c0_24 = arith.constant 0 : index
    %c0_25 = arith.constant 0 : index
    %47 = vector.load %arg2[%c0_22, %c0_23, %c0_24, %c0_25] : memref<1x3x16x128xf32, #tpu.memory_space<vmem>>, vector<1x1x16x128xf32>
    %48 = vector.shape_cast %47 : vector<1x1x16x128xf32> to vector<16x128xf32>
    %cst_26 = arith.constant 0.256789058 : f32
    %49 = vector.broadcast %cst_26 : f32 to vector<16x128xf32>
    %50 = arith.mulf %49, %48 : vector<16x128xf32>
    %c0_27 = arith.constant 0 : index
    %c1_28 = arith.constant 1 : index
    %c0_29 = arith.constant 0 : index
    %c0_30 = arith.constant 0 : index
    %51 = vector.load %arg2[%c0_27, %c1_28, %c0_29, %c0_30] : memref<1x3x16x128xf32, #tpu.memory_space<vmem>>, vector<1x1x16x128xf32>
    %52 = vector.shape_cast %51 : vector<1x1x16x128xf32> to vector<16x128xf32>
    %cst_31 = arith.constant 0.504128933 : f32
    %53 = vector.broadcast %cst_31 : f32 to vector<16x128xf32>
    %54 = arith.mulf %53, %52 : vector<16x128xf32>
    %55 = arith.addf %50, %54 : vector<16x128xf32>
    %c0_32 = arith.constant 0 : index
    %c2_33 = arith.constant 2 : index
    %c0_34 = arith.constant 0 : index
    %c0_35 = arith.constant 0 : index
    %56 = vector.load %arg2[%c0_32, %c2_33, %c0_34, %c0_35] : memref<1x3x16x128xf32, #tpu.memory_space<vmem>>, vector<1x1x16x128xf32>
    %57 = vector.shape_cast %56 : vector<1x1x16x128xf32> to vector<16x128xf32>
    %cst_36 = arith.constant 0.0979062467 : f32
    %58 = vector.broadcast %cst_36 : f32 to vector<16x128xf32>
    %59 = arith.mulf %58, %57 : vector<16x128xf32>
    %60 = arith.addf %55, %59 : vector<16x128xf32>
    %61 = tpu.iota {dimensions = array<i32: 0>} : vector<16x128xi32>
    %62 = tpu.iota {dimensions = array<i32: 1>} : vector<16x128xi32>
    %c0_i32_37 = arith.constant 0 : i32
    %63 = vector.broadcast %c0_i32_37 : i32 to vector<16x128xi32>
    %64 = arith.cmpi eq, %61, %63 : vector<16x128xi32>
    %c1_i32_38 = arith.constant 1 : i32
    %65 = tpu.dynamic_rotate %60 by %c1_i32_38 dim 0 : vector<16x128xf32>, i32 -> vector<16x128xf32>
    %cst_39 = arith.constant 0.000000e+00 : f32
    %66 = vector.broadcast %cst_39 : f32 to vector<16x128xf32>
    %67 = arith.select %64, %66, %65 : vector<16x128xi1>, vector<16x128xf32>
    %c15_i32_40 = arith.constant 15 : i32
    %68 = vector.broadcast %c15_i32_40 : i32 to vector<16x128xi32>
    %69 = arith.cmpi eq, %61, %68 : vector<16x128xi32>
    %c15_i32_41 = arith.constant 15 : i32
    %70 = tpu.dynamic_rotate %60 by %c15_i32_41 dim 0 : vector<16x128xf32>, i32 -> vector<16x128xf32>
    %cst_42 = arith.constant 0.000000e+00 : f32
    %71 = vector.broadcast %cst_42 : f32 to vector<16x128xf32>
    %72 = arith.select %69, %71, %70 : vector<16x128xi1>, vector<16x128xf32>
    %c0_i32_43 = arith.constant 0 : i32
    %73 = vector.broadcast %c0_i32_43 : i32 to vector<16x128xi32>
    %74 = arith.cmpi eq, %62, %73 : vector<16x128xi32>
    %c1_i32_44 = arith.constant 1 : i32
    %75 = tpu.dynamic_rotate %60 by %c1_i32_44 dim 1 : vector<16x128xf32>, i32 -> vector<16x128xf32>
    %cst_45 = arith.constant 0.000000e+00 : f32
    %76 = vector.broadcast %cst_45 : f32 to vector<16x128xf32>
    %77 = arith.select %74, %76, %75 : vector<16x128xi1>, vector<16x128xf32>
    %c127_i32_46 = arith.constant 127 : i32
    %78 = vector.broadcast %c127_i32_46 : i32 to vector<16x128xi32>
    %79 = arith.cmpi eq, %62, %78 : vector<16x128xi32>
    %c127_i32_47 = arith.constant 127 : i32
    %80 = tpu.dynamic_rotate %60 by %c127_i32_47 dim 1 : vector<16x128xf32>, i32 -> vector<16x128xf32>
    %cst_48 = arith.constant 0.000000e+00 : f32
    %81 = vector.broadcast %cst_48 : f32 to vector<16x128xf32>
    %82 = arith.select %79, %81, %80 : vector<16x128xi1>, vector<16x128xf32>
    %83 = arith.subf %72, %67 : vector<16x128xf32>
    %84 = arith.subf %82, %77 : vector<16x128xf32>
    %85 = arith.mulf %83, %83 : vector<16x128xf32>
    %86 = arith.mulf %84, %84 : vector<16x128xf32>
    %87 = arith.addf %85, %86 : vector<16x128xf32>
    %cst_49 = arith.constant 9.99999997E-7 : f32
    %88 = vector.broadcast %cst_49 : f32 to vector<16x128xf32>
    %89 = arith.addf %87, %88 : vector<16x128xf32>
    %90 = math.sqrt %89 : vector<16x128xf32>
    %91 = arith.subf %46, %90 : vector<16x128xf32>
    %92 = math.absf %91 : vector<16x128xf32>
    %c0_50 = arith.constant 0 : index
    %93 = memref.load %arg4[%c0_50] : memref<1xf32, #tpu.memory_space<smem>>
    %94 = vector.shape_cast %92 : vector<16x128xf32> to vector<1x16x128xf32>
    %cst_51 = arith.constant dense<0.000000e+00> : vector<1xf32>
    %95 = vector.multi_reduction <add>, %94, %cst_51 [1, 2] : vector<1x16x128xf32> to vector<1xf32>
    %96 = vector.shape_cast %95 : vector<1xf32> to vector<1x1x1xf32>
    %97 = vector.extract %96[0, 0, 0] : f32 from vector<1x1x1xf32>
    %98 = arith.addf %93, %97 : f32
    %c0_52 = arith.constant 0 : index
    %99 = memref.load %arg4[%c0_52] : memref<1xf32, #tpu.memory_space<smem>>
    memref.store %98, %arg4[%c0_52] : memref<1xf32, #tpu.memory_space<smem>>
    %c1_i32_53 = arith.constant 1 : i32
    %100 = arith.cmpi eq, %arg0, %c1_i32_53 : i32
    %101 = arith.extui %100 : i1 to i32
    %c0_i32_54 = arith.constant 0 : i32
    %102 = arith.cmpi ne, %101, %c0_i32_54 : i32
    scf.if %102 {
      %c0_55 = arith.constant 0 : index
      %103 = memref.load %arg4[%c0_55] : memref<1xf32, #tpu.memory_space<smem>>
      %c0_56 = arith.constant 0 : index
      %c0_57 = arith.constant 0 : index
      %104 = memref.load %arg3[%c0_56, %c0_57] : memref<1x1xf32, #tpu.memory_space<smem>>
      memref.store %103, %arg3[%c0_56, %c0_57] : memref<1x1xf32, #tpu.memory_space<smem>>
    } else {
    }
    return
  }
  func.func @transform_0(%arg0: i32) -> (i32, i32, i32, i32) {
    %c0_i32 = arith.constant 0 : i32
    %c0_i32_0 = arith.constant 0 : i32
    %c0_i32_1 = arith.constant 0 : i32
    %c0_i32_2 = arith.constant 0 : i32
    return %arg0, %c0_i32, %c0_i32_0, %c0_i32_1 : i32, i32, i32, i32
  }
  func.func @transform_1(%arg0: i32) -> (i32, i32, i32, i32) {
    %c0_i32 = arith.constant 0 : i32
    %c0_i32_0 = arith.constant 0 : i32
    %c0_i32_1 = arith.constant 0 : i32
    %c0_i32_2 = arith.constant 0 : i32
    return %arg0, %c0_i32, %c0_i32_0, %c0_i32_1 : i32, i32, i32, i32
  }
  func.func @transform_2(%arg0: i32) -> (i32, i32) {
    %c0_i32 = arith.constant 0 : i32
    %c0_i32_0 = arith.constant 0 : i32
    %c0_i32_1 = arith.constant 0 : i32
    return %c0_i32, %c0_i32_0 : i32, i32
  }
}

</mosaic_0001>

<llo_original>
// kernel: tpu_custom_call.1
$region0: #{tpu_custom_call.1}
  #allocation0 [shape = 'u32[]', space=smem, size = 0x4, offset = 0x4, fixed_abs, tag = 'smem constant byte address 0x4 - core index']
  #allocation1 [shape = 'u32[144,128]{1,0:T(1,128)}', space=vmem, size = 0x12000, scoped, tag = 'internal scratch']
  #allocation2 [shape = 'f32[1]{0:T(128)}', space=smem, size = 0x200, scoped, tag = 'scratch operand']
  %s0 = inlined_call_operand.hbm [shape: f32[2,3,16,128], index: 0, kind: input, shape index: {}]
  %s1 = inlined_call_operand.hbm [shape: f32[2,3,16,128], index: 1, kind: input, shape index: {}]
  %s2 = inlined_call_operand.hbm [shape: f32[1,1], index: 2, kind: output, shape index: {}]
  %s3 = sld [smem:[#allocation0]]
  $region57: #{tpu_custom_call.1} parent=0
    _
  %s5 = ssub.s32 1, %s3
  %s6 = scalar_select 0, %s5, %s3
  $region1: #{tpu_custom_call.1} parent=0
    #allocation3 [shape = 'u8[49152]{0}', space=vmem, size = 0xc000, scoped, tag = 'input window, operand 0']
    #allocation4 [shape = 's32[2]{0}', space=sflag, size = 0x8, scoped, tag = 'scoped memory for tpu_custom_call.1']
    #allocation5 [shape = 's32[2]{0}', space=sflag, size = 0x8, scoped, tag = 'scoped memory for tpu_custom_call.1']
    #allocation6 [shape = 'u8[49152]{0}', space=vmem, size = 0xc000, scoped, tag = 'input window, operand 1']
    #allocation7 [shape = 's32[2]{0}', space=sflag, size = 0x8, scoped, tag = 'scoped memory for tpu_custom_call.1']
    #allocation8 [shape = 'u8[512]{0}', space=smem, size = 0x200, scoped, tag = 'output window, operand 0, single buffered']
    %7 = vsyncpa [#allocation4], 0
    %s8 = scalar_lea.sflag [#allocation4], 1
    %9 = vsyncpa %s8, 0
    %10 = vsyncpa [#allocation7], 0
    %s11 = scalar_lea.sflag [#allocation7], 1
    %12 = vsyncpa %s11, 0
    %13 = vsyncpa [#allocation5], 0
    loop: start=0, step=1, limit=4
    $region2: #{tpu_custom_call.1} parent=1 // loop_pre_header
      _
    $region3: #{tpu_custom_call.1} parent=1 // loop_header
      %s15 = sphi 0, %s19
      %p16 = scmp.ge.s32.totalorder %s15, 4
      %s25 = sphi 0, %s27
      %s28 = sphi 0, %s25
      %s29 = sphi 0, %s28
      %s45 = sphi 0, %s29
      %s51 = sphi 0, %s53
      %s54 = sphi 0, %s51
      %s55 = sphi 0, %s54
      %s71 = sphi 0, %s55
      %s75 = sphi 0, %s75
      %s77 = sphi 0, %s75
      %s78 = sphi 0, %s77
      %s92 = sphi 0, %s78
    $region4: #{tpu_custom_call.1} parent=1 // loop_header_branch
      %18 = sbr.rel (%p16) target = $region8
    $region5: #{tpu_custom_call.1} parent=1 // loop_body
      %s20 = ssub.s32 %s15, 1
      %s21 = ssub.s32 %s15, 2
      %s22 = sadd.s32 %s15, 1
      %s23 = ssub.s32 %s15, %s22
      %p24 = scmp.eq.s32.totalorder %s23, 0
      %s26 = sadd.s32 %s25, 1
      %s27 = scalar_select %p24, %s25, %s26
      %p30 = pneg %p24
      %p31 = scmp.eq.s32.totalorder %s15, 1
      %p32 = por %p30, %p31
      %p33 = scmp.ne.s32.totalorder %s25, %s28
      %p34 = scmp.eq.s32.totalorder %s15, 0
      %p35 = por %p33, %p34
      %p36 = scmp.ne.s32.totalorder %s25, %s28
      %p37 = scmp.eq.s32.totalorder %s20, 1
      %p38 = por %p36, %p37
      %p39 = scmp.ne.s32.totalorder %s28, %s29
      %p40 = scmp.eq.s32.totalorder %s20, 0
      %p41 = por %p39, %p40
      %p42 = scmp.ne.s32.totalorder %s28, %s29
      %p43 = scmp.eq.s32.totalorder %s21, 1
      %p44 = por %p42, %p43
      %p46 = scmp.ne.s32.totalorder %s29, %s45
      %p47 = scmp.eq.s32.totalorder %s21, 0
      %p48 = por %p46, %p47
      %s49 = ssub.s32 %s15, %s22
      %p50 = scmp.eq.s32.totalorder %s49, 0
      %s52 = sadd.s32 %s51, 1
      %s53 = scalar_select %p50, %s51, %s52
      %p56 = pneg %p50
      %p57 = scmp.eq.s32.totalorder %s15, 1
      %p58 = por %p56, %p57
      %p59 = scmp.ne.s32.totalorder %s51, %s54
      %p60 = scmp.eq.s32.totalorder %s15, 0
      %p61 = por %p59, %p60
      %p62 = scmp.ne.s32.totalorder %s51, %s54
      %p63 = scmp.eq.s32.totalorder %s20, 1
      %p64 = por %p62, %p63
      %p65 = scmp.ne.s32.totalorder %s54, %s55
      %p66 = scmp.eq.s32.totalorder %s20, 0
      %p67 = por %p65, %p66
      %p68 = scmp.ne.s32.totalorder %s54, %s55
      %p69 = scmp.eq.s32.totalorder %s21, 1
      %p70 = por %p68, %p69
      %p72 = scmp.ne.s32.totalorder %s55, %s71
      %p73 = scmp.eq.s32.totalorder %s21, 0
      %p74 = por %p72, %p73
      %s76 = sadd.s32 %s75, 1
      %p79 = scmp.eq.s32.totalorder %s15, 1
      %p80 = scmp.ne.s32.totalorder %s75, %s77
      %p81 = scmp.eq.s32.totalorder %s15, 0
      %p82 = por %p80, %p81
      %p83 = scmp.ne.s32.totalorder %s75, %s77
      %p84 = scmp.eq.s32.totalorder %s20, 1
      %p85 = por %p83, %p84
      %p86 = scmp.ne.s32.totalorder %s77, %s78
      %p87 = scmp.eq.s32.totalorder %s20, 0
      %p88 = por %p86, %p87
      %p89 = scmp.ne.s32.totalorder %s77, %s78
      %p90 = scmp.eq.s32.totalorder %s21, 1
      %p91 = por %p89, %p90
      %p93 = scmp.ne.s32.totalorder %s78, %s92
      %p94 = scmp.eq.s32.totalorder %s21, 0
      %p95 = por %p93, %p94
      %p96 = scmp.le.s32.totalorder 1, %s15
      %p97 = scmp.lt.s32.totalorder %s15, 3
      %p98 = pnand %p96, %p97
      %p99 = pneg %p98
      // Predicated region
      $region9: #{tpu_custom_call.1} parent=5 // pred_check
        _
      $region10: #{tpu_custom_call.1} parent=5 // pred_check_branch
        %101 = sbr.rel (%p98) target = $region12
      $region11: #{tpu_custom_call.1} parent=5 // pred_region
        %s102 = ssub.s32 %s15, 1
      $region12: #{tpu_custom_call.1} parent=5 // pred_fallthru
        _
      %p103 = scmp.lt.s32.totalorder %s15, 2
      // Predicated region
      $region13: #{tpu_custom_call.1} parent=5 // pred_check
        %p104 = pneg %p103
      $region14: #{tpu_custom_call.1} parent=5 // pred_check_branch
        %106 = sbr.rel (%p104) target = $region16
      $region15: #{tpu_custom_call.1} parent=5 // pred_region
        // Predicated region
        $region17: #{tpu_custom_call.1} parent=15 // pred_check
          %p107 = pneg %p35
        $region18: #{tpu_custom_call.1} parent=15 // pred_check_branch
          %109 = sbr.rel (%p107) target = $region20
        $region19: #{tpu_custom_call.1} parent=15 // pred_region
          %s110 = sand.u32 %s25, 1
          %s111 = scalar_lea.sflag [#allocation4], %s110
          %s112 = sand.u32 %s25, 1
          %s113 = smul.addr %s112, 48
          %s114 = scalar_lea.vmem [#allocation3], %s113
          %s116 = ssub.s32 768, 768
          %117 = vsyncadd %s111, %s116
          %s118 = smul.addr %s15, 6
          %s119 = smul.addr %s118, 128
          %s120 = scalar_lea.hbm %s0, %s119
          %s121 = sshll.u32 %s114, 4
          %s122 = int_to_ptr.vmem [resolvable:$true] %s121
          %127 = dma.hbm_to_vmem [thread:$0]  %s120, 768, %s122, %s111, 128, 128, 8
        $region20: #{tpu_custom_call.1} parent=15 // pred_fallthru
          _
        // Predicated region
        $region21: #{tpu_custom_call.1} parent=15 // pred_check
          %p128 = pneg %p61
        $region22: #{tpu_custom_call.1} parent=15 // pred_check_branch
          %130 = sbr.rel (%p128) target = $region24
        $region23: #{tpu_custom_call.1} parent=15 // pred_region
          %s131 = sand.u32 %s51, 1
          %s132 = scalar_lea.sflag [#allocation7], %s131
          %s133 = sand.u32 %s51, 1
          %s134 = smul.addr %s133, 48
          %s135 = scalar_lea.vmem [#allocation6], %s134
          %s137 = ssub.s32 768, 768
          %138 = vsyncadd %s132, %s137
          %s139 = smul.addr %s15, 6
          %s140 = smul.addr %s139, 128
          %s141 = scalar_lea.hbm %s1, %s140
          %s142 = sshll.u32 %s135, 4
          %s143 = int_to_ptr.vmem [resolvable:$true] %s142
          %148 = dma.hbm_to_vmem [thread:$0]  %s141, 768, %s143, %s132, 128, 128, 8
        $region24: #{tpu_custom_call.1} parent=15 // pred_fallthru
          _
      $region16: #{tpu_custom_call.1} parent=5 // pred_fallthru
        _
      %p149 = scmp.le.s32.totalorder 1, %s15
      %p150 = scmp.lt.s32.totalorder %s15, 3
      %p151 = pnand %p149, %p150
      %p152 = pneg %p151
      // Predicated region
      $region25: #{tpu_custom_call.1} parent=5 // pred_check
        _
      $region26: #{tpu_custom_call.1} parent=5 // pred_check_branch
        %154 = sbr.rel (%p151) target = $region28
      $region27: #{tpu_custom_call.1} parent=5 // pred_region
        %s155 = ssub.s32 %s15, 1
        %s156 = sand.u32 %s28, 1
        %s157 = scalar_lea.sflag [#allocation4], %s156
        %s158 = sand.u32 %s28, 1
        %s159 = smul.addr %s158, 48
        %s160 = scalar_lea.vmem [#allocation3], %s159
        // Predicated region
        $region29: #{tpu_custom_call.1} parent=27 // pred_check
          %p161 = pneg %p41
        $region30: #{tpu_custom_call.1} parent=27 // pred_check_branch
          %163 = sbr.rel (%p161) target = $region32
        $region31: #{tpu_custom_call.1} parent=27 // pred_region
          %164 = dma.done %s157, 768
        $region32: #{tpu_custom_call.1} parent=27 // pred_fallthru
          _
        %s165 = sand.u32 %s54, 1
        %s166 = scalar_lea.sflag [#allocation7], %s165
        %s167 = sand.u32 %s54, 1
        %s168 = smul.addr %s167, 48
        %s169 = scalar_lea.vmem [#allocation6], %s168
        // Predicated region
        $region33: #{tpu_custom_call.1} parent=27 // pred_check
          %p170 = pneg %p67
        $region34: #{tpu_custom_call.1} parent=27 // pred_check_branch
          %172 = sbr.rel (%p170) target = $region36
        $region35: #{tpu_custom_call.1} parent=27 // pred_region
          %173 = dma.done %s166, 768
        $region36: #{tpu_custom_call.1} parent=27 // pred_fallthru
          _
        %s174 = sand.u32 %s28, 1
        %s175 = scalar_lea.sflag [#allocation4], %s174
        %s176 = sand.u32 %s28, 1
        %s177 = smul.addr %s176, 48
        %s178 = scalar_lea.vmem [#allocation3], %s177
        %p179 = pneg %p41
        %p180 = pneg %p38
        %s181 = sand.u32 %s54, 1
        %s182 = scalar_lea.sflag [#allocation7], %s181
        %s183 = sand.u32 %s54, 1
        %s184 = smul.addr %s183, 48
        %s185 = scalar_lea.vmem [#allocation6], %s184
        %p186 = pneg %p67
        %p187 = pneg %p64
        %p188 = pneg %p88
        %p189 = pneg %p85
        %p190 = scmp.eq.s32.totalorder %s20, 0
        // Predicated region
        $region37: #{tpu_custom_call.1} parent=27 // pred_check
          %p191 = pneg %p190
        $region38: #{tpu_custom_call.1} parent=27 // pred_check_branch
          %193 = sbr.rel (%p191) target = $region40
        $region39: #{tpu_custom_call.1} parent=27 // pred_region
          %s194 = scalar_lea.smem [#allocation2], 0
          %195 = sst [smem:[%s194]] 0.0
        $region40: #{tpu_custom_call.1} parent=27 // pred_fallthru
          _
        %v196 = vld [vmem:[%s160] sm:$0xff]
        %v197 = vld [vmem:[%s160 + $0x8] sm:$0xff]
        %v198 = vmul.f32 %v196, 0.25678906
        %v199 = vmul.f32 %v197, 0.25678906
        %s200 = scalar_lea.vmem %s160, 16 [#allocation3]
        %v201 = vld [vmem:[%s200] sm:$0xff]
        %v202 = vld [vmem:[%s200 + $0x8] sm:$0xff]
        %v203 = vmul.f32 %v201, 0.50412893
        %v204 = vmul.f32 %v202, 0.50412893
        %v205 = vadd.f32 %v198, %v203
        %v206 = vadd.f32 %v199, %v204
        %s207 = scalar_lea.vmem %s160, 32 [#allocation3]
        %v208 = vld [vmem:[%s207] sm:$0xff]
        %v209 = vld [vmem:[%s207 + $0x8] sm:$0xff]
        %v210 = vmul.f32 %v208, 0.09790625
        %v211 = vmul.f32 %v209, 0.09790625
        %v212 = vadd.f32 %v205, %v210
        %v213 = vadd.f32 %v206, %v211
        %v214 = vlaneseq
        %v215 = vshrl.u32 %v214, 7
        %v216 = vadd.s32 %v215, 8
        %v217 = vlaneseq
        %v218 = vand.u32 %v217, 127
        %vm219 = vcmp.eq.s32.totalorder %v215, 0
        %vm220 = vcmp.eq.s32.totalorder %v216, 0
        %v221 = vrot.slane %v212, 7
        %v222 = vrot.slane %v213, 7
        %vm223 = vcmp.lt.s32.totalorder %v215, 1
        %v224 = vsel %vm223, %v221, %v222
        %v225 = vsel %vm223, %v222, %v221
        %v226 = vsel %vm219, 0.0, %v225
        %v227 = vsel %vm220, 0.0, %v224
        %vm228 = vcmp.eq.s32.totalorder %v215, 15
        %vm229 = vcmp.eq.s32.totalorder %v216, 15
        %v230 = vrot.slane %v212, 1
        %v231 = vrot.slane %v213, 1
        %vm232 = vcmp.lt.s32.totalorder %v215, 7
        %v233 = vsel %vm232, %v230, %v231
        %v234 = vsel %vm232, %v231, %v230
        %v235 = vsel %vm228, 0.0, %v233
        %v236 = vsel %vm229, 0.0, %v234
        %vm237 = vcmp.eq.s32.totalorder %v218, 0
        %238 = vrot.lane.b32.xlu0 %v212, 1
        %v239 = vpop.permute.xlu0 %238
        %240 = vrot.lane.b32.xlu0 %v213, 1
        %v241 = vpop.permute.xlu0 %240
        %v242 = vsel %vm237, 0.0, %v239
        %v243 = vsel %vm237, 0.0, %v241
        %vm244 = vcmp.eq.s32.totalorder %v218, 127
        %245 = vrot.lane.b32.xlu0 %v212, 127
        %v246 = vpop.permute.xlu0 %245
        %247 = vrot.lane.b32.xlu0 %v213, 127
        %v248 = vpop.permute.xlu0 %247
        %v249 = vsel %vm244, 0.0, %v246
        %v250 = vsel %vm244, 0.0, %v248
        %v251 = vsub.f32 %v235, %v226
        %v252 = vsub.f32 %v236, %v227
        %v253 = vsub.f32 %v249, %v242
        %v254 = vsub.f32 %v250, %v243
        %v255 = vmul.f32 %v251, %v251
        %v256 = vmul.f32 %v252, %v252
        %v257 = vmul.f32 %v253, %v253
        %v258 = vmul.f32 %v254, %v254
        %v259 = vadd.f32 %v255, %v257
        %v260 = vadd.f32 %v256, %v258
        %v261 = vadd.f32 %v259, 1e-06
        %v262 = vadd.f32 %v260, 1e-06
        %v263 = vrsqrt.pop %v261
        %v264 = vmul.f32 %v261, %v263
        %vm265 = vcmp.eq.f32.partialorder %v261, inf
        %v266 = vsel %vm265, %v261, %v264
        %vm267 = vcmp.eq.f32.partialorder %v261, 0.0
        %v268 = vand.u32 %v261, 2147483648
        %v269 = vsel %vm267, %v268, %v266
        %v270 = vrsqrt.pop %v262
        %v271 = vmul.f32 %v262, %v270
        %vm272 = vcmp.eq.f32.partialorder %v262, inf
        %v273 = vsel %vm272, %v262, %v271
        %vm274 = vcmp.eq.f32.partialorder %v262, 0.0
        %v275 = vand.u32 %v262, 2147483648
        %v276 = vsel %vm274, %v275, %v273
        %v277 = vld [vmem:[%s169] sm:$0xff]
        %v278 = vld [vmem:[%s169 + $0x8] sm:$0xff]
        %v279 = vmul.f32 %v277, 0.25678906
        %v280 = vmul.f32 %v278, 0.25678906
        %s281 = scalar_lea.vmem %s169, 16 [#allocation6]
        %v282 = vld [vmem:[%s281] sm:$0xff]
        %v283 = vld [vmem:[%s281 + $0x8] sm:$0xff]
        %v284 = vmul.f32 %v282, 0.50412893
        %v285 = vmul.f32 %v283, 0.50412893
        %v286 = vadd.f32 %v279, %v284
        %v287 = vadd.f32 %v280, %v285
        %s288 = scalar_lea.vmem %s169, 32 [#allocation6]
        %v289 = vld [vmem:[%s288] sm:$0xff]
        %v290 = vld [vmem:[%s288 + $0x8] sm:$0xff]
        %v291 = vmul.f32 %v289, 0.09790625
        %v292 = vmul.f32 %v290, 0.09790625
        %v293 = vadd.f32 %v286, %v291
        %v294 = vadd.f32 %v287, %v292
        %v295 = vrot.slane %v293, 7
        %v296 = vrot.slane %v294, 7
        %v297 = vsel %vm223, %v295, %v296
        %v298 = vsel %vm223, %v296, %v295
        %v299 = vsel %vm219, 0.0, %v298
        %v300 = vsel %vm220, 0.0, %v297
        %v301 = vrot.slane %v293, 1
        %v302 = vrot.slane %v294, 1
        %v303 = vsel %vm232, %v301, %v302
        %v304 = vsel %vm232, %v302, %v301
        %v305 = vsel %vm228, 0.0, %v303
        %v306 = vsel %vm229, 0.0, %v304
        %307 = vrot.lane.b32.xlu0 %v293, 1
        %v308 = vpop.permute.xlu0 %307
        %309 = vrot.lane.b32.xlu0 %v294, 1
        %v310 = vpop.permute.xlu0 %309
        %v311 = vsel %vm237, 0.0, %v308
        %v312 = vsel %vm237, 0.0, %v310
        %313 = vrot.lane.b32.xlu0 %v293, 127
        %v314 = vpop.permute.xlu0 %313
        %315 = vrot.lane.b32.xlu0 %v294, 127
        %v316 = vpop.permute.xlu0 %315
        %v317 = vsel %vm244, 0.0, %v314
        %v318 = vsel %vm244, 0.0, %v316
        %v319 = vsub.f32 %v305, %v299
        %v320 = vsub.f32 %v306, %v300
        %v321 = vsub.f32 %v317, %v311
        %v322 = vsub.f32 %v318, %v312
        %v323 = vmul.f32 %v319, %v319
        %v324 = vmul.f32 %v320, %v320
        %v325 = vmul.f32 %v321, %v321
        %v326 = vmul.f32 %v322, %v322
        %v327 = vadd.f32 %v323, %v325
        %v328 = vadd.f32 %v324, %v326
        %v329 = vadd.f32 %v327, 1e-06
        %v330 = vadd.f32 %v328, 1e-06
        %v331 = vrsqrt.pop %v329
        %v332 = vmul.f32 %v329, %v331
        %vm333 = vcmp.eq.f32.partialorder %v329, inf
        %v334 = vsel %vm333, %v329, %v332
        %vm335 = vcmp.eq.f32.partialorder %v329, 0.0
        %v336 = vand.u32 %v329, 2147483648
        %v337 = vsel %vm335, %v336, %v334
        %v338 = vrsqrt.pop %v330
        %v339 = vmul.f32 %v330, %v338
        %vm340 = vcmp.eq.f32.partialorder %v330, inf
        %v341 = vsel %vm340, %v330, %v339
        %vm342 = vcmp.eq.f32.partialorder %v330, 0.0
        %v343 = vand.u32 %v330, 2147483648
        %v344 = vsel %vm342, %v343, %v341
        %v345 = vsub.f32 %v269, %v337
        %v346 = vsub.f32 %v276, %v344
        %v347 = vand.u32 2147483647, %v345
        %v348 = vand.u32 2147483647, %v346
        %s349 = sld [smem:[#allocation2]]
        %v350 = vadd.f32 %v347, %v348
        %351 = vadd.xlane.f32.xlu0 %v350
        %v352 = vpop.xlane.xlu0 %351
        %v353 = vrot.slane %v352, 4
        %v354 = vadd.f32 %v352, %v353
        %v355 = vrot.slane %v354, 2
        %v356 = vadd.f32 %v354, %v355
        %v357 = vrot.slane %v356, 1
        %v358 = vadd.f32 %v356, %v357
        %s359 = vtos %v358
        %s360 = sadd.f32 %s349, %s359
        %s361 = scalar_lea.smem [#allocation2], 0
        %362 = sst [smem:[%s361]] %s360
        %p363 = scmp.eq.s32.totalorder %s20, 1
        // Predicated region
        $region41: #{tpu_custom_call.1} parent=27 // pred_check
          %p364 = pneg %p363
        $region42: #{tpu_custom_call.1} parent=27 // pred_check_branch
          %366 = sbr.rel (%p364) target = $region44
        $region43: #{tpu_custom_call.1} parent=27 // pred_region
          %s367 = sld [smem:[#allocation2]]
          %s368 = scalar_lea.smem [#allocation8], 0
          %369 = sst [smem:[%s368]] %s367
        $region44: #{tpu_custom_call.1} parent=27 // pred_fallthru
          _
        // Predicated region
        $region45: #{tpu_custom_call.1} parent=27 // pred_check
          %p370 = pneg %p85
        $region46: #{tpu_custom_call.1} parent=27 // pred_check_branch
          %372 = sbr.rel (%p370) target = $region48
        $region47: #{tpu_custom_call.1} parent=27 // pred_region
          %s374 = ssub.s32 16, 16
          %375 = vsyncadd [#allocation5], %s374
          %378 = dma.smem_to_hbm [#allocation8], 16, %s2, [#allocation5]
        $region48: #{tpu_custom_call.1} parent=27 // pred_fallthru
          _
        // Predicated region
        $region49: #{tpu_custom_call.1} parent=27 // pred_check
          %p379 = pneg %p85
        $region50: #{tpu_custom_call.1} parent=27 // pred_check_branch
          %381 = sbr.rel (%p379) target = $region52
        $region51: #{tpu_custom_call.1} parent=27 // pred_region
          %382 = dma.done [#allocation5], 16
        $region52: #{tpu_custom_call.1} parent=27 // pred_fallthru
          _
        %383 = sfence
      $region28: #{tpu_custom_call.1} parent=5 // pred_fallthru
        _
      %p384 = scmp.le.s32.totalorder 2, %s15
      // Predicated region
      $region53: #{tpu_custom_call.1} parent=5 // pred_check
        %p385 = pneg %p384
      $region54: #{tpu_custom_call.1} parent=5 // pred_check_branch
        %387 = sbr.rel (%p385) target = $region56
      $region55: #{tpu_custom_call.1} parent=5 // pred_region
        %s388 = ssub.s32 %s15, 2
      $region56: #{tpu_custom_call.1} parent=5 // pred_fallthru
        _
    $region6: #{tpu_custom_call.1} parent=1 // loop_footer
      %s19 = sadd.s32 1, %s15
    $region7: #{tpu_custom_call.1} parent=1 // loop_footer_branch
      %14 = sbr.rel target = $region3
    $region8: #{tpu_custom_call.1} parent=1 // loop_exit
      _
    %389 = vsyncpa [#allocation4], 1
    %s390 = scalar_lea.sflag [#allocation4], 1
    %391 = vsyncpa %s390, 1
    %392 = vsyncpa [#allocation7], 1
    %s393 = scalar_lea.sflag [#allocation7], 1
    %394 = vsyncpa %s393, 1
    %395 = vsyncpa [#allocation5], 1
    %s396 = scalar_lea.sflag [#allocation5], 1
    %397 = vsyncpa %s396, 1

</llo_original>
